<compile_context>
chip_gen: v5e
topology: v5e:2x2
jax: 0.10.0
libtpu: 0.0.40
codegen_flags: <defaults>
</compile_context>

<pallas_src>
import jax
import jax.numpy as jnp
from jax import lax
from jax.experimental import pallas as pl
from jax.experimental.pallas import tpu as pltpu


def _linear_fused_bias_kernel(x_ref, wb_ref, o_ref):
    # x_ref:  (B, H)      input features
    # wb_ref: (H+1, E)    rows [0:H] = W^T, row [H] = bias
    # o_ref:  (B, E)      logits
    H = x_ref.shape[1]
    y = lax.dot_general(
        x_ref[...],
        wb_ref[:H, :],                       # (H, E) -> canonical (M,K)@(K,N)
        dimension_numbers=(((1,), (0,)), ((), ())),
        preferred_element_type=jnp.float32,  # f32 accumulation on the MXU
    )
    o_ref[...] = (y + wb_ref[H:, :]).astype(o_ref.dtype)  # (1, E) broadcast add


def prepare_weighting_network_params(weight, bias):
    """One-time (init-time) parameter packing.

    Args:
      weight: (E, H) float32, nn.Linear weight (PyTorch convention).
      bias:   (E,)   float32, nn.Linear bias.

    Returns:
      (H+1, E) float32 slab: rows [0:H] = W^T, row [H] = bias.
    """
    return jnp.concatenate([weight.T, bias[None, :]], axis=0)


@jax.jit
def weighting_network_forward(pooled_supcon_fea_cls, wb):
    """Pallas implementation of weighting_network.forward.

    Eval-mode path only: Dropout(0.1) is identity (must not be used for
    training-mode forward).

    Args:
      pooled_supcon_fea_cls: (B, H) float32 pooled CLS features.
      wb: (H+1, E) float32 packed parameters from
          prepare_weighting_network_params.

    Returns:
      (B, E) float32 logits.
    """
    B, H = pooled_supcon_fea_cls.shape
    E = wb.shape[1]

    vmem = pltpu.MemorySpace.VMEM
    return pl.pallas_call(
        _linear_fused_bias_kernel,
        out_shape=jax.ShapeDtypeStruct((B, E), jnp.float32),
        in_specs=[
            pl.BlockSpec(memory_space=vmem),  # x  (B, H)
            pl.BlockSpec(memory_space=vmem),  # wb (H+1, E)
        ],
        out_specs=pl.BlockSpec(memory_space=vmem),
        cost_estimate=pl.CostEstimate(
            flops=2 * B * H * E,
            bytes_accessed=(B * H + (H + 1) * E + B * E) * 4,
            transcendentals=0,
        ),
    )(pooled_supcon_fea_cls, wb)


if __name__ == "__main__":
    # Small, forward-pass-consistent shapes:
    #   batch = 2, hidden_size = 32, emotion_size = 8
    B, H, E = 2, 32, 8

    key = jax.random.PRNGKey(0)
    kx, kw, kb = jax.random.split(key, 3)

    # Deterministic synthetic parameters (nn.Linear(hidden_size, emotion_size)).
    x = jax.random.normal(kx, (B, H), dtype=jnp.float32)
    weight = jax.random.normal(kw, (E, H), dtype=jnp.float32) * 0.02
    bias = jax.random.normal(kb, (E,), dtype=jnp.float32) * 0.01

    # One-time parameter packing (outside the hot path).
    wb = jax.block_until_ready(prepare_weighting_network_params(weight, bias))

    logits = weighting_network_forward(x, wb)
    logits = jax.block_until_ready(logits)

    # Reference check in plain JAX (same math as the PyTorch module).
    ref = x @ weight.T + bias
    assert logits.shape == (B, E)
    assert jnp.allclose(logits, ref, atol=1e-5, rtol=1e-5)

    print("KERNEL_OK")
</pallas_src>

<mosaic_0001>
module attributes {stable_mosaic.version = 11 : i64} {
  func.func @_linear_fused_bias_kernel(%arg0: memref<2x32xf32, #tpu.memory_space<vmem>>, %arg1: memref<33x8xf32, #tpu.memory_space<vmem>>, %arg2: memref<2x8xf32, #tpu.memory_space<vmem>>) attributes {dimension_semantics = [], scalar_prefetch = 0 : i64, scratch_operands = 0 : i64, tpu.core_type = #tpu.core_type<tc>} {
    %c0 = arith.constant 0 : index
    %c0_0 = arith.constant 0 : index
    %0 = vector.load %arg0[%c0, %c0_0] : memref<2x32xf32, #tpu.memory_space<vmem>>, vector<2x32xf32>
    %c0_1 = arith.constant 0 : index
    %c0_2 = arith.constant 0 : index
    %1 = vector.load %arg1[%c0_1, %c0_2] : memref<33x8xf32, #tpu.memory_space<vmem>>, vector<32x8xf32>
    %cst = arith.constant dense<0.000000e+00> : vector<2x8xf32>
    %2 = tpu.matmul %0, %1, %cst {dimension_numbers = #tpu.dot_dimension_numbers<[1], [0], [0], [1], [0, 0, 1, 1], [], []>} : vector<2x32xf32>, vector<32x8xf32>, vector<2x8xf32> -> vector<2x8xf32>
    %c32 = arith.constant 32 : index
    %c0_3 = arith.constant 0 : index
    %3 = vector.load %arg1[%c32, %c0_3] : memref<33x8xf32, #tpu.memory_space<vmem>>, vector<1x8xf32>
    %4 = vector.broadcast %3 : vector<1x8xf32> to vector<2x8xf32>
    %5 = arith.addf %2, %4 : vector<2x8xf32>
    %c0_4 = arith.constant 0 : index
    %c0_5 = arith.constant 0 : index
    %6 = vector.load %arg2[%c0_4, %c0_5] : memref<2x8xf32, #tpu.memory_space<vmem>>, vector<2x8xf32>
    tpu.vector_store %arg2[%c0_4, %c0_5], %5 {strides = array<i32>} : memref<2x8xf32, #tpu.memory_space<vmem>>, vector<2x8xf32>,
    return
  }
}

</mosaic_0001>

<llo_original>
// kernel: weighting_network_forward.1
$region0: #{weighting_network_forward.1}
  #allocation0 [shape = 'u32[]', space=smem, size = 0x4, offset = 0x4, fixed_abs, tag = 'smem constant byte address 0x4 - core index']
  #allocation1 [shape = 'u32[72,128]{1,0:T(1,128)}', space=vmem, size = 0x9000, scoped, tag = 'internal scratch']
  %s0 = inlined_call_operand.vmem [shape: f32[2,32], index: 0, kind: input, shape index: {}]
  %s1 = inlined_call_operand.vmem [shape: f32[33,8], index: 1, kind: input, shape index: {}]
  %s2 = inlined_call_operand.hbm [shape: f32[2,8], index: 2, kind: output, shape index: {}]
  %s3 = sld [smem:[#allocation0]]
  $region18: #{weighting_network_forward.1} parent=0
    _
  %s5 = ssub.s32 1, %s3
  %s6 = scalar_select 0, %s5, %s3
  $region1: #{weighting_network_forward.1} parent=0
    #allocation2 [shape = 'u8[1024]{0}', space=vmem, size = 0x400, scoped, tag = 'output window, operand 0, single buffered']
    #allocation3 [shape = 's32[1]{0}', space=sflag, size = 0x4, scoped, tag = 'scoped memory for weighting_network_forward.1']
    %7 = vsyncpa [#allocation3], 0
    // Predicated region
    $region2: #{weighting_network_forward.1} parent=1 // pred_check
      _
    $region3: #{weighting_network_forward.1} parent=1 // pred_check_branch
      %9 = sbr.rel (0) target = $region5
    $region4: #{weighting_network_forward.1} parent=1 // pred_region
      _
    $region5: #{weighting_network_forward.1} parent=1 // pred_fallthru
      _
    // Predicated region
    $region6: #{weighting_network_forward.1} parent=1 // pred_check
      _
    $region7: #{weighting_network_forward.1} parent=1 // pred_check_branch
      %11 = sbr.rel (0) target = $region9
    $region8: #{weighting_network_forward.1} parent=1 // pred_region
      _
    $region9: #{weighting_network_forward.1} parent=1 // pred_fallthru
      _
    %v12 = vld [vmem:[%s0] sm:$0x3]
    %v13 = vld [vmem:[%s1] sm:$0xff]
    %v14 = vld [vmem:[%s1 + $0x8] sm:$0xff]
    %v15 = vld [vmem:[%s1 + $0x10] sm:$0xff]
    %v16 = vld [vmem:[%s1 + $0x18] sm:$0xff]
    %v17 = vld [vmem:[%s1 + $0x20] sm:$0x1]
    %v18 = vperm.slane %v17, 0
    %vm19 = vcmask 261120
    %v21 = vsel %vm19, %v12, 0
    %23 = vmatpush.msra.mxu0 0.0
    %24 = vmatpush.msra.mxu0 0.0
    %25 = vmatpush.msra.mxu0 0.0
    %26 = vmatpush.msra.mxu0 0.0
    %27 = vmatpush.msra.mxu0 0.0
    %28 = vmatpush.msra.mxu0 0.0
    %29 = vmatpush.msra.mxu0 0.0
    %30 = vmatpush.msra.mxu0 0.0
    %31 = vmatpush.msra.mxu0 0.0
    %32 = vmatpush.msra.mxu0 0.0
    %33 = vmatpush.msra.mxu0 0.0
    %34 = vmatpush.msra.mxu0 0.0
    %35 = vmatpush.msra.mxu0 %v16
    %36 = vmatpush.msra.mxu0 %v15
    %37 = vmatpush.msra.mxu0 %v14
    %38 = vmatpush.msra.mxu0 %v13
    %39 = vmatmul.f32.gmra.mxu0 %v21
    %v40 = vpop.f32.mrf.mxu0
    %v41 = vadd.f32 %v18, %v40
    %42 = vdwg.mxu0
    %vm43 = vcmask 58368
    %44 = vst.msk [vmem:[#allocation2] sm:$0x3] %vm43, %v41
    // Predicated region
    $region10: #{weighting_network_forward.1} parent=1 // pred_check
      _
    $region11: #{weighting_network_forward.1} parent=1 // pred_check_branch
      %46 = sbr.rel (0) target = $region13
    $region12: #{weighting_network_forward.1} parent=1 // pred_region
      %48 = vsyncadd [#allocation3], 0
      %s50 = sshll.u32 [#allocation2], 4
      %s51 = int_to_ptr.vmem [resolvable:$true] %s50
      %s52 = sshll.u32 %s2, 4
      %s53 = int_to_ptr.hbm [resolvable:$true] %s52
      %55 = dma.vmem_to_hbm [thread:$0]  %s51, 32, %s53, [#allocation3]
    $region13: #{weighting_network_forward.1} parent=1 // pred_fallthru
      _
    // Predicated region
    $region14: #{weighting_network_forward.1} parent=1 // pred_check
      _
    $region15: #{weighting_network_forward.1} parent=1 // pred_check_branch
      %57 = sbr.rel (0) target = $region17
    $region16: #{weighting_network_forward.1} parent=1 // pred_region
      %59 = dma.done [#allocation3], 32
    $region17: #{weighting_network_forward.1} parent=1 // pred_fallthru
      _
    %60 = vsyncpa [#allocation3], 1

</llo_original>
